<compile_context>
chip_gen: v5e
topology: v5e:2x2
jax: 0.10.0
libtpu: 0.0.40
codegen_flags: <defaults>
</compile_context>

<pallas_src>
import functools

import jax
import jax.numpy as jnp
from jax import lax
from jax.experimental import pallas as pl
from jax.experimental.pallas import tpu as pltpu


# --------------------------------------------------------------------------
# small helpers
# --------------------------------------------------------------------------
def _cdiv(a, b):
    return -(-a // b)


def _tpu_vmem_capacity_bytes():
    try:
        return int(pltpu.get_tpu_info().vmem_capacity_bytes)
    except Exception:
        return 64 * 1024 * 1024  # conservative (v7x-sized) fallback


def _gen_budgets():
    """(per-block byte budget, vmem_limit_bytes) derived from the chip generation."""
    cap = _tpu_vmem_capacity_bytes()
    if cap <= 64 * 1024 * 1024:                      # v7x: 64 MiB physical
        return 4 * 1024 * 1024, 32 * 1024 * 1024
    return 8 * 1024 * 1024, 64 * 1024 * 1024         # v5e / v6e: 128 MiB physical


def _equalize_tensors(a, b):
    """Minimal JAX port of swyft.equalize_tensors (used by the pure-JAX reference)."""
    n, m = a.shape[0], b.shape[0]
    if n == m:
        return a, b
    if n == 1:
        return jnp.broadcast_to(a, (m,) + a.shape[1:]), b
    if m == 1:
        return a, jnp.broadcast_to(b, (n,) + b.shape[1:])
    if n < m:
        assert m % n == 0
        return jnp.tile(a, (m // n,) + (1,) * (a.ndim - 1)), b
    assert n % m == 0
    return a, jnp.tile(b, (n // m,) + (1,) * (b.ndim - 1))


# --------------------------------------------------------------------------
# Pallas kernels
# --------------------------------------------------------------------------
def _stats_kernel(x_ref, z_ref, state_in_ref, state_ref, coeff_ref, acc_ref, *,
                  momentum, is_first, minstd, batch, tile_b):
    """Batch-tiled running-statistics pass.

    Grid axis 0 walks the batch ("arbitrary").  Shifted sufficient statistics
    are accumulated into acc_ref rows [Σdx, Σdx², Σdz, Σdz², Σdx·dz, shift_x,
    shift_z, 0]; the momentum update and the folded apply coefficients are
    produced on the last grid step.
    """
    i = pl.program_id(0)
    nb = pl.num_programs(0)
    x = x_ref[...].astype(jnp.float32)
    z = z_ref[...].astype(jnp.float32)
    n = x.shape[1]

    # valid-row mask (handles a partial last tile and z batches larger than B)
    row = lax.broadcasted_iota(jnp.int32, x.shape, 0) + i * tile_b
    valid = row < batch

    @pl.when(i == 0)
    def _init():
        inv_cnt = 1.0 / min(tile_b, batch)   # python constant
        xm0 = jnp.sum(jnp.where(valid, x, 0.0), axis=0, keepdims=True) * inv_cnt
        zm0 = jnp.sum(jnp.where(valid, z, 0.0), axis=0, keepdims=True) * inv_cnt
        acc_ref[0:5, :] = jnp.zeros((5, n), jnp.float32)
        acc_ref[5:6, :] = xm0
        acc_ref[6:7, :] = zm0
        acc_ref[7:8, :] = jnp.zeros((1, n), jnp.float32)

    shift_x = acc_ref[5:6, :]
    shift_z = acc_ref[6:7, :]
    dx = jnp.where(valid, x - shift_x, 0.0)
    dz = jnp.where(valid, z - shift_z, 0.0)
    acc_ref[0:1, :] += jnp.sum(dx, axis=0, keepdims=True)
    acc_ref[1:2, :] += jnp.sum(dx * dx, axis=0, keepdims=True)
    acc_ref[2:3, :] += jnp.sum(dz, axis=0, keepdims=True)
    acc_ref[3:4, :] += jnp.sum(dz * dz, axis=0, keepdims=True)
    acc_ref[4:5, :] += jnp.sum(dx * dz, axis=0, keepdims=True)

    @pl.when(i == nb - 1)
    def _finalize():
        inv_b = 1.0 / batch
        mdx = acc_ref[0:1, :] * inv_b
        mdz = acc_ref[2:3, :] * inv_b
        x_mean_b = acc_ref[5:6, :] + mdx
        z_mean_b = acc_ref[6:7, :] + mdz
        x_var_b = jnp.maximum(acc_ref[1:2, :] * inv_b - mdx * mdx, 0.0)
        z_var_b = jnp.maximum(acc_ref[3:4, :] * inv_b - mdz * mdz, 0.0)
        xz_cov_b = acc_ref[4:5, :] * inv_b - mdx * mdz

        if is_first:
            x_mean, x_var = x_mean_b, x_var_b
            z_mean, z_var = z_mean_b, z_var_b
            xz_cov = xz_cov_b
        else:
            m = momentum
            x_mean = (1.0 - m) * state_in_ref[0:1, :] + m * x_mean_b
            x_var = (1.0 - m) * state_in_ref[1:2, :] + m * x_var_b
            z_mean = (1.0 - m) * state_in_ref[2:3, :] + m * z_mean_b
            z_var = (1.0 - m) * state_in_ref[3:4, :] + m * z_var_b
            xz_cov = (1.0 - m) * state_in_ref[4:5, :] + m * xz_cov_b

        # running-state rows (mirrors the module's buffers)
        state_ref[0:1, :] = x_mean
        state_ref[1:2, :] = x_var
        state_ref[2:3, :] = z_mean
        state_ref[3:4, :] = z_var
        state_ref[4:5, :] = xz_cov
        state_ref[5:8, :] = jnp.zeros((3, n), jnp.float32)

        # folded apply coefficients: lr = c0 + a*dx*dz - bx*dx^2 - bz*dz^2
        inv_x_std = lax.rsqrt(x_var)          # EUP; matches 1/sqrt(var) incl. inf for var==0
        inv_z_std = lax.rsqrt(z_var)
        rho = xz_cov * inv_x_std * inv_z_std
        rho_max = (1.0 - minstd * minstd) ** 0.5
        rho = jnp.clip(rho, -rho_max, rho_max)
        om = 1.0 - rho * rho
        inv_om = 1.0 / om
        c0 = -0.5 * jnp.log(om)
        a = rho * inv_om * inv_x_std * inv_z_std
        bx = 0.5 * rho * rho * inv_om * (inv_x_std * inv_x_std)
        bz = 0.5 * rho * rho * inv_om * (inv_z_std * inv_z_std)

        coeff_ref[0:1, :] = x_mean
        coeff_ref[1:2, :] = z_mean
        coeff_ref[2:3, :] = c0
        coeff_ref[3:4, :] = a
        coeff_ref[4:5, :] = bx
        coeff_ref[5:6, :] = bz
        coeff_ref[6:8, :] = jnp.zeros((2, n), jnp.float32)


def _apply_kernel(coeff_ref, x_ref, z_ref, lr_ref):
    """Elementwise logratio evaluation with frozen, folded coefficients.

    Pure mul/add on the VPU — no per-element divide/sqrt/log.  Inputs may be
    bf16 (upcast after load); output is f32 to match the reference module.
    """
    x_mean = coeff_ref[0:1, :]
    z_mean = coeff_ref[1:2, :]
    c0 = coeff_ref[2:3, :]
    a = coeff_ref[3:4, :]
    bx = coeff_ref[4:5, :]
    bz = coeff_ref[5:6, :]

    dx = x_ref[...].astype(jnp.float32) - x_mean
    dz = z_ref[...].astype(jnp.float32) - z_mean
    lr_ref[...] = c0 + a * (dx * dz) - bx * (dx * dx) - bz * (dz * dz)


# --------------------------------------------------------------------------
# tiling plans
# --------------------------------------------------------------------------
def _stats_tile(batch, n, itemsize, block_budget):
    if batch < 8:
        return batch                              # full-dim block (allowed)
    target = block_budget // max(n * itemsize, 1)
    target = max(8, (target // 8) * 8)
    return max(8, min(target, (batch // 8) * 8))


def _pick_repack(b1, b2, n):
    """Largest k with (n*k) % 128 == 0, n*k <= 1024, b1 % k == 0, b2 % k == 0."""
    k = 1
    cand = 1
    while n * (cand + 1) <= 1024:
        cand += 1
        if (n * cand) % 128 == 0 and b1 % cand == 0 and b2 % cand == 0:
            k = cand
    return k


def _plan_apply(bx, bz, n, itemsize, block_budget):
    """Return (lane-repack factor k, row tile, materialize-repeat flag)."""
    k = _pick_repack(bx, bz, n)
    rx, rz = bx // k, bz // k
    rmin, rmax = min(rx, rz), max(rx, rz)
    nk = n * k
    target = max(8, (block_budget // max(nk * itemsize, 1)) // 8 * 8)

    if rx == rz or rmin == 1:
        rows = rmax
        tile_b = rows if rows < 8 else max(8, min(target, (rows // 8) * 8))
        return k, tile_b, False

    if rmin % 8 == 0 and rmax % rmin == 0:
        # smaller operand repeats at block granularity via an index_map modulo;
        # row tile must divide the smaller (packed) row count.
        tile_b, t = 8, 8
        upper = min(target, rmin)
        while t <= upper:
            if rmin % t == 0:
                tile_b = t
            t += 8
        return k, tile_b, False

    # awkward alignment: materialize the repeat once, then it's the equal case.
    bo = max(bx, bz)
    k = _pick_repack(bo, bo, n)
    nk = n * k
    target = max(8, (block_budget // max(nk * itemsize, 1)) // 8 * 8)
    rows = bo // k
    tile_b = rows if rows < 8 else max(8, min(target, (rows // 8) * 8))
    return k, tile_b, True


# --------------------------------------------------------------------------
# jitted kernel launchers
# --------------------------------------------------------------------------
@functools.partial(jax.jit,
                   static_argnames=("batch", "tile_b", "momentum", "is_first",
                                    "minstd", "vmem_limit"))
def _stats_call(x, z, state_in, *, batch, tile_b, momentum, is_first, minstd,
                vmem_limit):
    n = x.shape[1]
    grid = _cdiv(batch, tile_b)
    kernel = functools.partial(_stats_kernel, momentum=momentum,
                               is_first=is_first, minstd=minstd,
                               batch=batch, tile_b=tile_b)
    return pl.pallas_call(
        kernel,
        out_shape=(jax.ShapeDtypeStruct((8, n), jnp.float32),
                   jax.ShapeDtypeStruct((8, n), jnp.float32)),
        grid=(grid,),
        in_specs=[pl.BlockSpec((tile_b, n), lambda i: (i, 0)),   # x tiles
                  pl.BlockSpec((tile_b, n), lambda i: (i, 0)),   # z tiles (first B rows)
                  pl.BlockSpec((8, n), lambda i: (0, 0))],       # running state (resident)
        out_specs=(pl.BlockSpec((8, n), lambda i: (0, 0)),
                   pl.BlockSpec((8, n), lambda i: (0, 0))),
        scratch_shapes=[pltpu.VMEM((8, n), jnp.float32)],
        compiler_params=pltpu.CompilerParams(
            dimension_semantics=("arbitrary",),                  # reduction axis
            vmem_limit_bytes=vmem_limit),
    )(x, z, state_in)


@functools.partial(jax.jit,
                   static_argnames=("k", "tile_b", "materialize", "vmem_limit"))
def _apply_call(coeffs, x, z, *, k, tile_b, materialize, vmem_limit):
    n = x.shape[1]
    if materialize:  # rare fallback for awkward repeat/tile alignment
        bo = max(x.shape[0], z.shape[0])
        if x.shape[0] != bo:
            x = jnp.tile(x, (bo // x.shape[0], 1))
        if z.shape[0] != bo:
            z = jnp.tile(z, (bo // z.shape[0], 1))

    nk = n * k
    if k > 1:
        coeffs = jnp.tile(coeffs, (1, k))          # tiny (8, nk)
        x = x.reshape(x.shape[0] // k, nk)         # free row-major relabel
        z = z.reshape(z.shape[0] // k, nk)

    rx, rz = x.shape[0], z.shape[0]
    rows = max(rx, rz)
    grid = _cdiv(rows, tile_b)

    def spec_for(r):
        if r == rows:
            return pl.BlockSpec((tile_b, nk), lambda i: (i, 0))
        if r == 1:
            return pl.BlockSpec((1, nk), lambda i: (0, 0))       # block-level broadcast
        nb = r // tile_b
        return pl.BlockSpec((tile_b, nk), lambda i: (i % nb, 0))  # block-level repeat

    lr = pl.pallas_call(
        _apply_kernel,
        out_shape=jax.ShapeDtypeStruct((rows, nk), jnp.float32),
        grid=(grid,),
        in_specs=[pl.BlockSpec((8, nk), lambda i: (0, 0)),        # coeffs: resident
                  spec_for(rx), spec_for(rz)],
        out_specs=pl.BlockSpec((tile_b, nk), lambda i: (i, 0)),
        compiler_params=pltpu.CompilerParams(
            dimension_semantics=("parallel",),                    # shards across v7x TCs
            vmem_limit_bytes=vmem_limit),
    )(coeffs, x, z)

    if k > 1:
        lr = lr.reshape(rows * k, n)
    return lr


# --------------------------------------------------------------------------
# Python wrapper (mirrors the nn.Module; running stats kept host-side)
# --------------------------------------------------------------------------
class LogRatioEstimator1dimGaussian:
    """JAX/Pallas port of swyft LogRatioEstimator_1dim_Gaussian (no learnable params)."""

    def __init__(self, num_params, varnames="z", momentum=0.1, minstd=0.001):
        self.num_params = int(num_params)
        self.momentum = float(momentum)
        self.minstd = float(minstd)
        self.training = True
        self.state = None    # (8, N): [x_mean, x_var, z_mean, z_var, xz_cov, 0,0,0]
        self.coeffs = None   # (8, N): [x_mean, z_mean, c0, a, bx, bz, 0, 0]
        self._block_budget, self._vmem_limit = _gen_budgets()
        if isinstance(varnames, list):
            self.varnames = [[v] for v in varnames]
        else:
            self.varnames = [[f"{varnames}[{i}]"] for i in range(self.num_params)]

    def __call__(self, x, z):
        x = jnp.asarray(x)
        z = jnp.asarray(z)
        if x.dtype not in (jnp.bfloat16, jnp.float32):
            x = x.astype(jnp.float32)
        if z.dtype not in (jnp.bfloat16, jnp.float32):
            z = z.astype(jnp.float32)
        B, N = x.shape
        assert N == self.num_params and z.shape[1] == N

        if self.training or self.state is None:
            # Stats use the first len(x) samples of z (assumed jointly drawn);
            # z is passed unsliced — the grid only visits its first B rows.
            assert z.shape[0] >= B
            is_first = self.state is None
            state_in = self.state if not is_first else jnp.zeros((8, N), jnp.float32)
            tile_b = _stats_tile(B, N, x.dtype.itemsize, self._block_budget)
            # NOTE: batch size / is_first are baked into the trace -> one extra
            # compile on the first->subsequent transition (numerically identical).
            self.state, self.coeffs = _stats_call(
                x, z, state_in, batch=B, tile_b=tile_b,
                momentum=self.momentum, is_first=is_first, minstd=self.minstd,
                vmem_limit=self._vmem_limit)

        Bx, Bz = x.shape[0], z.shape[0]
        assert Bx == Bz or max(Bx, Bz) % min(Bx, Bz) == 0
        k, tile_b, materialize = _plan_apply(Bx, Bz, N, x.dtype.itemsize,
                                             self._block_budget)
        logratios = _apply_call(self.coeffs, x, z, k=k, tile_b=tile_b,
                                materialize=materialize,
                                vmem_limit=self._vmem_limit)

        Bo = max(Bx, Bz)
        if Bz == Bo:
            ze = z
        elif Bz == 1:
            ze = jnp.broadcast_to(z, (Bo, N))
        else:
            ze = jnp.tile(z, (Bo // Bz, 1))
        params = ze[..., None]                 # z.unsqueeze(-1)
        # TODO(synk): swyft returns a LogRatioSamples dataclass; emitted as a dict here.
        return {
            "logratios": logratios,
            "params": params,
            "parnames": self.varnames,
            "metadata": {"type": "Gaussian1d"},
        }


# --------------------------------------------------------------------------
# Pure-JAX stateful reference (mirrors the PyTorch module exactly)
# --------------------------------------------------------------------------
class _Reference:
    def __init__(self, momentum=0.1, minstd=0.001):
        self.momentum = momentum
        self.minstd = minstd
        self.x_mean = self.x_var = None
        self.z_mean = self.z_var = None
        self.xz_cov = None

    def __call__(self, x, z, training=True):
        if training or self.x_mean is None:
            B = x.shape[0]
            xm = x[:B].mean(0)
            zm = z[:B].mean(0)
            xv = ((x[:B] - xm) ** 2).mean(0)
            zv = ((z[:B] - zm) ** 2).mean(0)
            cv = ((x[:B] - xm) * (z[:B] - zm)).mean(0)
            m = self.momentum
            self.x_mean = xm if self.x_mean is None else (1 - m) * self.x_mean + m * xm
            self.x_var = xv if self.x_var is None else (1 - m) * self.x_var + m * xv
            self.z_mean = zm if self.z_mean is None else (1 - m) * self.z_mean + m * zm
            self.z_var = zv if self.z_var is None else (1 - m) * self.z_var + m * zv
            self.xz_cov = cv if self.xz_cov is None else (1 - m) * self.xz_cov + m * cv
        xe, ze = _equalize_tensors(x, z)
        xb = (xe - self.x_mean) / jnp.sqrt(self.x_var)
        zb = (ze - self.z_mean) / jnp.sqrt(self.z_var)
        rho = self.xz_cov / jnp.sqrt(self.x_var) / jnp.sqrt(self.z_var)
        rmax = (1 - self.minstd ** 2) ** 0.5
        rho = jnp.clip(rho, -rmax, rmax)
        om = 1 - rho ** 2
        return (-0.5 * jnp.log(om) + rho / om * xb * zb
                - 0.5 * rho ** 2 / om * (xb ** 2 + zb ** 2))


# --------------------------------------------------------------------------
if __name__ == "__main__":
    key = jax.random.PRNGKey(0)
    B, N = 8, 16  # batch, num_params
    k1, k2, k3, k4 = jax.random.split(key, 4)

    # moderately correlated x/z so rho is non-trivial but well conditioned
    z1 = jax.random.normal(k1, (B, N), jnp.float32)
    x1 = 0.4 * z1 + 0.9 * jax.random.normal(k2, (B, N), jnp.float32) + 1.5

    est = LogRatioEstimator1dimGaussian(num_params=N, varnames="z",
                                        momentum=0.1, minstd=0.001)
    ref = _Reference(momentum=0.1, minstd=0.001)
    TOL = dict(atol=1e-3, rtol=1e-3)

    # ---- call 1: training, equal batches -> tiled stats + lane-dense apply ----
    out1 = est(x1, z1)
    lr1 = jax.block_until_ready(out1["logratios"])
    ref1 = ref(x1, z1, training=True)
    assert lr1.shape == (B, N)
    assert out1["params"].shape == (B, N, 1)
    assert bool(jnp.all(jnp.isfinite(lr1)))
    assert jnp.allclose(lr1, ref1, **TOL), "call 1 mismatch vs reference"

    # ---- call 2: training, larger contrastive z batch -> block-level repeat ----
    z2 = jax.random.normal(k3, (2 * B, N), jnp.float32)
    x2 = 0.4 * z2[:B] + 0.9 * jax.random.normal(k4, (B, N), jnp.float32) + 1.5
    out2 = est(x2, z2)
    lr2 = jax.block_until_ready(out2["logratios"])
    ref2 = ref(x2, z2, training=True)
    assert lr2.shape == (2 * B, N)
    assert out2["params"].shape == (2 * B, N, 1)
    assert jnp.allclose(lr2, ref2, **TOL), "call 2 mismatch vs reference"

    # ---- call 3: eval mode -> frozen stats, apply-only kernel ----
    est.training = False
    out3 = est(x1, z1)
    lr3 = jax.block_until_ready(out3["logratios"])
    ref3 = ref(x1, z1, training=False)
    assert lr3.shape == (B, N)
    assert jnp.allclose(lr3, ref3, **TOL), "call 3 mismatch vs reference"

    print("KERNEL_OK")
</pallas_src>

<mosaic_0001>
module attributes {stable_mosaic.version = 11 : i64} {
  func.func @_stats_kernel(%arg0: i32, %arg1: memref<8x16xf32, #tpu.memory_space<vmem>>, %arg2: memref<8x16xf32, #tpu.memory_space<vmem>>, %arg3: memref<8x16xf32, #tpu.memory_space<vmem>>, %arg4: memref<8x16xf32, #tpu.memory_space<vmem>>, %arg5: memref<8x16xf32, #tpu.memory_space<vmem>>, %arg6: memref<8x16xf32, #tpu.memory_space<vmem>>) attributes {dimension_semantics = [#tpu.dimension_semantics<arbitrary>], iteration_bounds = array<i64: 1>, scalar_prefetch = 0 : i64, scratch_operands = 1 : i64, tpu.core_type = #tpu.core_type<tc>, window_params = [{transform_indices = @transform_0, window_bounds = array<i64: 8, 16>}, {transform_indices = @transform_1, window_bounds = array<i64: 8, 16>}, {pipeline_mode = #tpu.pipeline_mode<synchronous>, transform_indices = @transform_2, window_bounds = array<i64: 8, 16>}, {pipeline_mode = #tpu.pipeline_mode<synchronous>, transform_indices = @transform_3, window_bounds = array<i64: 8, 16>}, {pipeline_mode = #tpu.pipeline_mode<synchronous>, transform_indices = @transform_4, window_bounds = array<i64: 8, 16>}]} {
    %c0 = arith.constant 0 : index
    %c0_0 = arith.constant 0 : index
    %0 = vector.load %arg1[%c0, %c0_0] : memref<8x16xf32, #tpu.memory_space<vmem>>, vector<8x16xf32>
    %c0_1 = arith.constant 0 : index
    %c0_2 = arith.constant 0 : index
    %1 = vector.load %arg2[%c0_1, %c0_2] : memref<8x16xf32, #tpu.memory_space<vmem>>, vector<8x16xf32>
    %2 = tpu.iota {dimensions = array<i32: 0>} : vector<8x16xi32>
    %c8_i32 = arith.constant 8 : i32
    %3 = arith.muli %arg0, %c8_i32 : i32
    %4 = vector.broadcast %3 : i32 to vector<8x16xi32>
    %5 = arith.addi %2, %4 : vector<8x16xi32>
    %c8_i32_3 = arith.constant 8 : i32
    %6 = vector.broadcast %c8_i32_3 : i32 to vector<8x16xi32>
    %7 = arith.cmpi slt, %5, %6 : vector<8x16xi32>
    %c0_i32 = arith.constant 0 : i32
    %8 = arith.cmpi eq, %arg0, %c0_i32 : i32
    %9 = arith.extui %8 : i1 to i32
    %c0_i32_4 = arith.constant 0 : i32
    %10 = arith.cmpi ne, %9, %c0_i32_4 : i32
    scf.if %10 {
      %cst_31 = arith.constant 0.000000e+00 : f32
      %52 = vector.broadcast %cst_31 : f32 to vector<8x16xf32>
      %53 = arith.select %7, %0, %52 : vector<8x16xi1>, vector<8x16xf32>
      %cst_32 = arith.constant dense<0.000000e+00> : vector<16xf32>
      %54 = vector.multi_reduction <add>, %53, %cst_32 [0] : vector<8x16xf32> to vector<16xf32>
      %55 = vector.shape_cast %54 : vector<16xf32> to vector<1x16xf32>
      %cst_33 = arith.constant 1.250000e-01 : f32
      %56 = vector.broadcast %cst_33 : f32 to vector<1x16xf32>
      %57 = arith.mulf %55, %56 : vector<1x16xf32>
      %cst_34 = arith.constant 0.000000e+00 : f32
      %58 = vector.broadcast %cst_34 : f32 to vector<8x16xf32>
      %59 = arith.select %7, %1, %58 : vector<8x16xi1>, vector<8x16xf32>
      %cst_35 = arith.constant dense<0.000000e+00> : vector<16xf32>
      %60 = vector.multi_reduction <add>, %59, %cst_35 [0] : vector<8x16xf32> to vector<16xf32>
      %61 = vector.shape_cast %60 : vector<16xf32> to vector<1x16xf32>
      %cst_36 = arith.constant 1.250000e-01 : f32
      %62 = vector.broadcast %cst_36 : f32 to vector<1x16xf32>
      %63 = arith.mulf %61, %62 : vector<1x16xf32>
      %cst_37 = arith.constant 0.000000e+00 : f32
      %64 = vector.broadcast %cst_37 : f32 to vector<5x16xf32>
      %c0_38 = arith.constant 0 : index
      %c0_39 = arith.constant 0 : index
      %65 = vector.load %arg6[%c0_38, %c0_39] : memref<8x16xf32, #tpu.memory_space<vmem>>, vector<5x16xf32>
      tpu.vector_store %arg6[%c0_38, %c0_39], %64 {strides = array<i32>} : memref<8x16xf32, #tpu.memory_space<vmem>>, vector<5x16xf32>,
      %c5_40 = arith.constant 5 : index
      %c0_41 = arith.constant 0 : index
      %66 = vector.load %arg6[%c5_40, %c0_41] : memref<8x16xf32, #tpu.memory_space<vmem>>, vector<1x16xf32>
      tpu.vector_store %arg6[%c5_40, %c0_41], %57 {strides = array<i32>} : memref<8x16xf32, #tpu.memory_space<vmem>>, vector<1x16xf32>,
      %c6_42 = arith.constant 6 : index
      %c0_43 = arith.constant 0 : index
      %67 = vector.load %arg6[%c6_42, %c0_43] : memref<8x16xf32, #tpu.memory_space<vmem>>, vector<1x16xf32>
      tpu.vector_store %arg6[%c6_42, %c0_43], %63 {strides = array<i32>} : memref<8x16xf32, #tpu.memory_space<vmem>>, vector<1x16xf32>,
      %cst_44 = arith.constant 0.000000e+00 : f32
      %68 = vector.broadcast %cst_44 : f32 to vector<1x16xf32>
      %c7 = arith.constant 7 : index
      %c0_45 = arith.constant 0 : index
      %69 = vector.load %arg6[%c7, %c0_45] : memref<8x16xf32, #tpu.memory_space<vmem>>, vector<1x16xf32>
      tpu.vector_store %arg6[%c7, %c0_45], %68 {strides = array<i32>} : memref<8x16xf32, #tpu.memory_space<vmem>>, vector<1x16xf32>,
    } else {
    }
    %c5 = arith.constant 5 : index
    %c0_5 = arith.constant 0 : index
    %11 = vector.load %arg6[%c5, %c0_5] : memref<8x16xf32, #tpu.memory_space<vmem>>, vector<1x16xf32>
    %c6 = arith.constant 6 : index
    %c0_6 = arith.constant 0 : index
    %12 = vector.load %arg6[%c6, %c0_6] : memref<8x16xf32, #tpu.memory_space<vmem>>, vector<1x16xf32>
    %13 = vector.broadcast %11 : vector<1x16xf32> to vector<8x16xf32>
    %14 = arith.subf %0, %13 : vector<8x16xf32>
    %cst = arith.constant 0.000000e+00 : f32
    %15 = vector.broadcast %cst : f32 to vector<8x16xf32>
    %16 = arith.select %7, %14, %15 : vector<8x16xi1>, vector<8x16xf32>
    %17 = vector.broadcast %12 : vector<1x16xf32> to vector<8x16xf32>
    %18 = arith.subf %1, %17 : vector<8x16xf32>
    %cst_7 = arith.constant 0.000000e+00 : f32
    %19 = vector.broadcast %cst_7 : f32 to vector<8x16xf32>
    %20 = arith.select %7, %18, %19 : vector<8x16xi1>, vector<8x16xf32>
    %c0_8 = arith.constant 0 : index
    %c0_9 = arith.constant 0 : index
    %21 = vector.load %arg6[%c0_8, %c0_9] : memref<8x16xf32, #tpu.memory_space<vmem>>, vector<1x16xf32>
    %cst_10 = arith.constant dense<0.000000e+00> : vector<16xf32>
    %22 = vector.multi_reduction <add>, %16, %cst_10 [0] : vector<8x16xf32> to vector<16xf32>
    %23 = vector.shape_cast %22 : vector<16xf32> to vector<1x16xf32>
    %24 = arith.addf %21, %23 : vector<1x16xf32>
    %c0_11 = arith.constant 0 : index
    %c0_12 = arith.constant 0 : index
    %25 = vector.load %arg6[%c0_11, %c0_12] : memref<8x16xf32, #tpu.memory_space<vmem>>, vector<1x16xf32>
    tpu.vector_store %arg6[%c0_11, %c0_12], %24 {strides = array<i32>} : memref<8x16xf32, #tpu.memory_space<vmem>>, vector<1x16xf32>,
    %c1 = arith.constant 1 : index
    %c0_13 = arith.constant 0 : index
    %26 = vector.load %arg6[%c1, %c0_13] : memref<8x16xf32, #tpu.memory_space<vmem>>, vector<1x16xf32>
    %27 = arith.mulf %16, %16 : vector<8x16xf32>
    %cst_14 = arith.constant dense<0.000000e+00> : vector<16xf32>
    %28 = vector.multi_reduction <add>, %27, %cst_14 [0] : vector<8x16xf32> to vector<16xf32>
    %29 = vector.shape_cast %28 : vector<16xf32> to vector<1x16xf32>
    %30 = arith.addf %26, %29 : vector<1x16xf32>
    %c1_15 = arith.constant 1 : index
    %c0_16 = arith.constant 0 : index
    %31 = vector.load %arg6[%c1_15, %c0_16] : memref<8x16xf32, #tpu.memory_space<vmem>>, vector<1x16xf32>
    tpu.vector_store %arg6[%c1_15, %c0_16], %30 {strides = array<i32>} : memref<8x16xf32, #tpu.memory_space<vmem>>, vector<1x16xf32>,
    %c2 = arith.constant 2 : index
    %c0_17 = arith.constant 0 : index
    %32 = vector.load %arg6[%c2, %c0_17] : memref<8x16xf32, #tpu.memory_space<vmem>>, vector<1x16xf32>
    %cst_18 = arith.constant dense<0.000000e+00> : vector<16xf32>
    %33 = vector.multi_reduction <add>, %20, %cst_18 [0] : vector<8x16xf32> to vector<16xf32>
    %34 = vector.shape_cast %33 : vector<16xf32> to vector<1x16xf32>
    %35 = arith.addf %32, %34 : vector<1x16xf32>
    %c2_19 = arith.constant 2 : index
    %c0_20 = arith.constant 0 : index
    %36 = vector.load %arg6[%c2_19, %c0_20] : memref<8x16xf32, #tpu.memory_space<vmem>>, vector<1x16xf32>
    tpu.vector_store %arg6[%c2_19, %c0_20], %35 {strides = array<i32>} : memref<8x16xf32, #tpu.memory_space<vmem>>, vector<1x16xf32>,
    %c3 = arith.constant 3 : index
    %c0_21 = arith.constant 0 : index
    %37 = vector.load %arg6[%c3, %c0_21] : memref<8x16xf32, #tpu.memory_space<vmem>>, vector<1x16xf32>
    %38 = arith.mulf %20, %20 : vector<8x16xf32>
    %cst_22 = arith.constant dense<0.000000e+00> : vector<16xf32>
    %39 = vector.multi_reduction <add>, %38, %cst_22 [0] : vector<8x16xf32> to vector<16xf32>
    %40 = vector.shape_cast %39 : vector<16xf32> to vector<1x16xf32>
    %41 = arith.addf %37, %40 : vector<1x16xf32>
    %c3_23 = arith.constant 3 : index
    %c0_24 = arith.constant 0 : index
    %42 = vector.load %arg6[%c3_23, %c0_24] : memref<8x16xf32, #tpu.memory_space<vmem>>, vector<1x16xf32>
    tpu.vector_store %arg6[%c3_23, %c0_24], %41 {strides = array<i32>} : memref<8x16xf32, #tpu.memory_space<vmem>>, vector<1x16xf32>,
    %c4 = arith.constant 4 : index
    %c0_25 = arith.constant 0 : index
    %43 = vector.load %arg6[%c4, %c0_25] : memref<8x16xf32, #tpu.memory_space<vmem>>, vector<1x16xf32>
    %44 = arith.mulf %16, %20 : vector<8x16xf32>
    %cst_26 = arith.constant dense<0.000000e+00> : vector<16xf32>
    %45 = vector.multi_reduction <add>, %44, %cst_26 [0] : vector<8x16xf32> to vector<16xf32>
    %46 = vector.shape_cast %45 : vector<16xf32> to vector<1x16xf32>
    %47 = arith.addf %43, %46 : vector<1x16xf32>
    %c4_27 = arith.constant 4 : index
    %c0_28 = arith.constant 0 : index
    %48 = vector.load %arg6[%c4_27, %c0_28] : memref<8x16xf32, #tpu.memory_space<vmem>>, vector<1x16xf32>
    tpu.vector_store %arg6[%c4_27, %c0_28], %47 {strides = array<i32>} : memref<8x16xf32, #tpu.memory_space<vmem>>, vector<1x16xf32>,
    %c0_i32_29 = arith.constant 0 : i32
    %49 = arith.cmpi eq, %arg0, %c0_i32_29 : i32
    %50 = arith.extui %49 : i1 to i32
    %c0_i32_30 = arith.constant 0 : i32
    %51 = arith.cmpi ne, %50, %c0_i32_30 : i32
    scf.if %51 {
      %c0_31 = arith.constant 0 : index
      %c0_32 = arith.constant 0 : index
      %52 = vector.load %arg6[%c0_31, %c0_32] : memref<8x16xf32, #tpu.memory_space<vmem>>, vector<1x16xf32>
      %cst_33 = arith.constant 1.250000e-01 : f32
      %53 = vector.broadcast %cst_33 : f32 to vector<1x16xf32>
      %54 = arith.mulf %52, %53 : vector<1x16xf32>
      %c2_34 = arith.constant 2 : index
      %c0_35 = arith.constant 0 : index
      %55 = vector.load %arg6[%c2_34, %c0_35] : memref<8x16xf32, #tpu.memory_space<vmem>>, vector<1x16xf32>
      %cst_36 = arith.constant 1.250000e-01 : f32
      %56 = vector.broadcast %cst_36 : f32 to vector<1x16xf32>
      %57 = arith.mulf %55, %56 : vector<1x16xf32>
      %c5_37 = arith.constant 5 : index
      %c0_38 = arith.constant 0 : index
      %58 = vector.load %arg6[%c5_37, %c0_38] : memref<8x16xf32, #tpu.memory_space<vmem>>, vector<1x16xf32>
      %59 = arith.addf %58, %54 : vector<1x16xf32>
      %c6_39 = arith.constant 6 : index
      %c0_40 = arith.constant 0 : index
      %60 = vector.load %arg6[%c6_39, %c0_40] : memref<8x16xf32, #tpu.memory_space<vmem>>, vector<1x16xf32>
      %61 = arith.addf %60, %57 : vector<1x16xf32>
      %c1_41 = arith.constant 1 : index
      %c0_42 = arith.constant 0 : index
      %62 = vector.load %arg6[%c1_41, %c0_42] : memref<8x16xf32, #tpu.memory_space<vmem>>, vector<1x16xf32>
      %cst_43 = arith.constant 1.250000e-01 : f32
      %63 = vector.broadcast %cst_43 : f32 to vector<1x16xf32>
      %64 = arith.mulf %62, %63 : vector<1x16xf32>
      %65 = arith.mulf %54, %54 : vector<1x16xf32>
      %66 = arith.subf %64, %65 : vector<1x16xf32>
      %cst_44 = arith.constant 0.000000e+00 : f32
      %67 = vector.broadcast %cst_44 : f32 to vector<1x16xf32>
      %68 = arith.maximumf %66, %67 : vector<1x16xf32>
      %c3_45 = arith.constant 3 : index
      %c0_46 = arith.constant 0 : index
      %69 = vector.load %arg6[%c3_45, %c0_46] : memref<8x16xf32, #tpu.memory_space<vmem>>, vector<1x16xf32>
      %cst_47 = arith.constant 1.250000e-01 : f32
      %70 = vector.broadcast %cst_47 : f32 to vector<1x16xf32>
      %71 = arith.mulf %69, %70 : vector<1x16xf32>
      %72 = arith.mulf %57, %57 : vector<1x16xf32>
      %73 = arith.subf %71, %72 : vector<1x16xf32>
      %cst_48 = arith.constant 0.000000e+00 : f32
      %74 = vector.broadcast %cst_48 : f32 to vector<1x16xf32>
      %75 = arith.maximumf %73, %74 : vector<1x16xf32>
      %c4_49 = arith.constant 4 : index
      %c0_50 = arith.constant 0 : index
      %76 = vector.load %arg6[%c4_49, %c0_50] : memref<8x16xf32, #tpu.memory_space<vmem>>, vector<1x16xf32>
      %cst_51 = arith.constant 1.250000e-01 : f32
      %77 = vector.broadcast %cst_51 : f32 to vector<1x16xf32>
      %78 = arith.mulf %76, %77 : vector<1x16xf32>
      %79 = arith.mulf %54, %57 : vector<1x16xf32>
      %80 = arith.subf %78, %79 : vector<1x16xf32>
      %c0_52 = arith.constant 0 : index
      %c0_53 = arith.constant 0 : index
      %81 = vector.load %arg4[%c0_52, %c0_53] : memref<8x16xf32, #tpu.memory_space<vmem>>, vector<1x16xf32>
      tpu.vector_store %arg4[%c0_52, %c0_53], %59 {strides = array<i32>} : memref<8x16xf32, #tpu.memory_space<vmem>>, vector<1x16xf32>,
      %c1_54 = arith.constant 1 : index
      %c0_55 = arith.constant 0 : index
      %82 = vector.load %arg4[%c1_54, %c0_55] : memref<8x16xf32, #tpu.memory_space<vmem>>, vector<1x16xf32>
      tpu.vector_store %arg4[%c1_54, %c0_55], %68 {strides = array<i32>} : memref<8x16xf32, #tpu.memory_space<vmem>>, vector<1x16xf32>,
      %c2_56 = arith.constant 2 : index
      %c0_57 = arith.constant 0 : index
      %83 = vector.load %arg4[%c2_56, %c0_57] : memref<8x16xf32, #tpu.memory_space<vmem>>, vector<1x16xf32>
      tpu.vector_store %arg4[%c2_56, %c0_57], %61 {strides = array<i32>} : memref<8x16xf32, #tpu.memory_space<vmem>>, vector<1x16xf32>,
      %c3_58 = arith.constant 3 : index
      %c0_59 = arith.constant 0 : index
      %84 = vector.load %arg4[%c3_58, %c0_59] : memref<8x16xf32, #tpu.memory_space<vmem>>, vector<1x16xf32>
      tpu.vector_store %arg4[%c3_58, %c0_59], %75 {strides = array<i32>} : memref<8x16xf32, #tpu.memory_space<vmem>>, vector<1x16xf32>,
      %c4_60 = arith.constant 4 : index
      %c0_61 = arith.constant 0 : index
      %85 = vector.load %arg4[%c4_60, %c0_61] : memref<8x16xf32, #tpu.memory_space<vmem>>, vector<1x16xf32>
      tpu.vector_store %arg4[%c4_60, %c0_61], %80 {strides = array<i32>} : memref<8x16xf32, #tpu.memory_space<vmem>>, vector<1x16xf32>,
      %cst_62 = arith.constant 0.000000e+00 : f32
      %86 = vector.broadcast %cst_62 : f32 to vector<3x16xf32>
      %c5_63 = arith.constant 5 : index
      %c0_64 = arith.constant 0 : index
      %87 = vector.load %arg4[%c5_63, %c0_64] : memref<8x16xf32, #tpu.memory_space<vmem>>, vector<3x16xf32>
      tpu.vector_store %arg4[%c5_63, %c0_64], %86 {strides = array<i32>} : memref<8x16xf32, #tpu.memory_space<vmem>>, vector<3x16xf32>,
      %88 = math.rsqrt %68 : vector<1x16xf32>
      %89 = math.rsqrt %75 : vector<1x16xf32>
      %90 = arith.mulf %80, %88 : vector<1x16xf32>
      %91 = arith.mulf %90, %89 : vector<1x16xf32>
      %cst_65 = arith.constant -0.999999523 : f32
      %cst_66 = arith.constant 0.999999523 : f32
      %92 = vector.broadcast %cst_65 : f32 to vector<1x16xf32>
      %93 = arith.maximumf %92, %91 : vector<1x16xf32>
      %94 = vector.broadcast %cst_66 : f32 to vector<1x16xf32>
      %95 = arith.minimumf %94, %93 : vector<1x16xf32>
      %96 = arith.mulf %95, %95 : vector<1x16xf32>
      %cst_67 = arith.constant 1.000000e+00 : f32
      %97 = vector.broadcast %cst_67 : f32 to vector<1x16xf32>
      %98 = arith.subf %97, %96 : vector<1x16xf32>
      %cst_68 = arith.constant 1.000000e+00 : f32
      %99 = vector.broadcast %cst_68 : f32 to vector<1x16xf32>
      %100 = arith.divf %99, %98 : vector<1x16xf32>
      %101 = math.log %98 : vector<1x16xf32>
      %cst_69 = arith.constant -5.000000e-01 : f32
      %102 = vector.broadcast %cst_69 : f32 to vector<1x16xf32>
      %103 = arith.mulf %102, %101 : vector<1x16xf32>
      %104 = arith.mulf %95, %100 : vector<1x16xf32>
      %105 = arith.mulf %104, %88 : vector<1x16xf32>
      %106 = arith.mulf %105, %89 : vector<1x16xf32>
      %cst_70 = arith.constant 5.000000e-01 : f32
      %107 = vector.broadcast %cst_70 : f32 to vector<1x16xf32>
      %108 = arith.mulf %107, %95 : vector<1x16xf32>
      %109 = arith.mulf %108, %95 : vector<1x16xf32>
      %110 = arith.mulf %109, %100 : vector<1x16xf32>
      %111 = arith.mulf %88, %88 : vector<1x16xf32>
      %112 = arith.mulf %110, %111 : vector<1x16xf32>
      %cst_71 = arith.constant 5.000000e-01 : f32
      %113 = vector.broadcast %cst_71 : f32 to vector<1x16xf32>
      %114 = arith.mulf %113, %95 : vector<1x16xf32>
      %115 = arith.mulf %114, %95 : vector<1x16xf32>
      %116 = arith.mulf %115, %100 : vector<1x16xf32>
      %117 = arith.mulf %89, %89 : vector<1x16xf32>
      %118 = arith.mulf %116, %117 : vector<1x16xf32>
      %c0_72 = arith.constant 0 : index
      %c0_73 = arith.constant 0 : index
      %119 = vector.load %arg5[%c0_72, %c0_73] : memref<8x16xf32, #tpu.memory_space<vmem>>, vector<1x16xf32>
      tpu.vector_store %arg5[%c0_72, %c0_73], %59 {strides = array<i32>} : memref<8x16xf32, #tpu.memory_space<vmem>>, vector<1x16xf32>,
      %c1_74 = arith.constant 1 : index
      %c0_75 = arith.constant 0 : index
      %120 = vector.load %arg5[%c1_74, %c0_75] : memref<8x16xf32, #tpu.memory_space<vmem>>, vector<1x16xf32>
      tpu.vector_store %arg5[%c1_74, %c0_75], %61 {strides = array<i32>} : memref<8x16xf32, #tpu.memory_space<vmem>>, vector<1x16xf32>,
      %c2_76 = arith.constant 2 : index
      %c0_77 = arith.constant 0 : index
      %121 = vector.load %arg5[%c2_76, %c0_77] : memref<8x16xf32, #tpu.memory_space<vmem>>, vector<1x16xf32>
      tpu.vector_store %arg5[%c2_76, %c0_77], %103 {strides = array<i32>} : memref<8x16xf32, #tpu.memory_space<vmem>>, vector<1x16xf32>,
      %c3_78 = arith.constant 3 : index
      %c0_79 = arith.constant 0 : index
      %122 = vector.load %arg5[%c3_78, %c0_79] : memref<8x16xf32, #tpu.memory_space<vmem>>, vector<1x16xf32>
      tpu.vector_store %arg5[%c3_78, %c0_79], %106 {strides = array<i32>} : memref<8x16xf32, #tpu.memory_space<vmem>>, vector<1x16xf32>,
      %c4_80 = arith.constant 4 : index
      %c0_81 = arith.constant 0 : index
      %123 = vector.load %arg5[%c4_80, %c0_81] : memref<8x16xf32, #tpu.memory_space<vmem>>, vector<1x16xf32>
      tpu.vector_store %arg5[%c4_80, %c0_81], %112 {strides = array<i32>} : memref<8x16xf32, #tpu.memory_space<vmem>>, vector<1x16xf32>,
      %c5_82 = arith.constant 5 : index
      %c0_83 = arith.constant 0 : index
      %124 = vector.load %arg5[%c5_82, %c0_83] : memref<8x16xf32, #tpu.memory_space<vmem>>, vector<1x16xf32>
      tpu.vector_store %arg5[%c5_82, %c0_83], %118 {strides = array<i32>} : memref<8x16xf32, #tpu.memory_space<vmem>>, vector<1x16xf32>,
      %cst_84 = arith.constant 0.000000e+00 : f32
      %125 = vector.broadcast %cst_84 : f32 to vector<2x16xf32>
      %c6_85 = arith.constant 6 : index
      %c0_86 = arith.constant 0 : index
      %126 = vector.load %arg5[%c6_85, %c0_86] : memref<8x16xf32, #tpu.memory_space<vmem>>, vector<2x16xf32>
      tpu.vector_store %arg5[%c6_85, %c0_86], %125 {strides = array<i32>} : memref<8x16xf32, #tpu.memory_space<vmem>>, vector<2x16xf32>,
    } else {
    }
    return
  }
  func.func @transform_0(%arg0: i32) -> (i32, i32) {
    %c0_i32 = arith.constant 0 : i32
    %c0_i32_0 = arith.constant 0 : i32
    return %arg0, %c0_i32 : i32, i32
  }
  func.func @transform_1(%arg0: i32) -> (i32, i32) {
    %c0_i32 = arith.constant 0 : i32
    %c0_i32_0 = arith.constant 0 : i32
    return %arg0, %c0_i32 : i32, i32
  }
  func.func @transform_2(%arg0: i32) -> (i32, i32) {
    %c0_i32 = arith.constant 0 : i32
    %c0_i32_0 = arith.constant 0 : i32
    %c0_i32_1 = arith.constant 0 : i32
    return %c0_i32, %c0_i32_0 : i32, i32
  }
  func.func @transform_3(%arg0: i32) -> (i32, i32) {
    %c0_i32 = arith.constant 0 : i32
    %c0_i32_0 = arith.constant 0 : i32
    %c0_i32_1 = arith.constant 0 : i32
    return %c0_i32, %c0_i32_0 : i32, i32
  }
  func.func @transform_4(%arg0: i32) -> (i32, i32) {
    %c0_i32 = arith.constant 0 : i32
    %c0_i32_0 = arith.constant 0 : i32
    %c0_i32_1 = arith.constant 0 : i32
    return %c0_i32, %c0_i32_0 : i32, i32
  }
}

</mosaic_0001>

<llo_original>
// kernel: _stats_call.1
$region0: #{_stats_call.1}
  #allocation0 [shape = 'u32[]', space=smem, size = 0x4, offset = 0x4, fixed_abs, tag = 'smem constant byte address 0x4 - core index']
  #allocation1 [shape = 'u32[72,128]{1,0:T(1,128)}', space=vmem, size = 0x9000, scoped, tag = 'internal scratch']
  #allocation2 [shape = 'f32[8,16]{1,0:T(8,128)}', space=vmem, size = 0x1000, scoped, tag = 'scratch operand']
  %s0 = inlined_call_operand.hbm [shape: f32[8,16], index: 0, kind: input, shape index: {}]
  %s1 = inlined_call_operand.hbm [shape: f32[8,16], index: 1, kind: input, shape index: {}]
  %s2 = inlined_call_operand.hbm [shape: f32[8,16], index: 2, kind: input, shape index: {}]
  %s3 = inlined_call_operand.hbm [shape: f32[8,16], index: 3, kind: output, shape index: {0}]
  %s4 = inlined_call_operand.hbm [shape: f32[8,16], index: 4, kind: output, shape index: {1}]
  %5 = xla_tuple %s3, %s4
  %s6 = sld [smem:[#allocation0]]
  $region50: #{_stats_call.1} parent=0
    _
  %s8 = ssub.s32 1, %s6
  %s9 = scalar_select 0, %s8, %s6
  $region1: #{_stats_call.1} parent=0
    #allocation3 [shape = 'u8[4096]{0}', space=vmem, size = 0x1000, scoped, tag = 'input window, operand 0, single buffered']
    #allocation4 [shape = 's32[1]{0}', space=sflag, size = 0x4, scoped, tag = 'scoped memory for _stats_call.1']
    #allocation5 [shape = 's32[1]{0}', space=sflag, size = 0x4, scoped, tag = 'scoped memory for _stats_call.1']
    #allocation6 [shape = 'u8[4096]{0}', space=vmem, size = 0x1000, scoped, tag = 'input window, operand 1, single buffered']
    #allocation7 [shape = 's32[1]{0}', space=sflag, size = 0x4, scoped, tag = 'scoped memory for _stats_call.1']
    #allocation8 [shape = 'u8[4096]{0}', space=vmem, size = 0x1000, scoped, tag = 'input window, operand 2, single buffered']
    #allocation9 [shape = 'u8[4096]{0}', space=vmem, size = 0x1000, scoped, tag = 'output window, operand 0, single buffered']
    #allocation10 [shape = 'u8[4096]{0}', space=vmem, size = 0x1000, scoped, tag = 'output window, operand 1, single buffered']
    #allocation11 [shape = 's32[1]{0}', space=sflag, size = 0x4, scoped, tag = 'scoped memory for _stats_call.1']
    %10 = vsyncpa [#allocation4], 0
    %11 = vsyncpa [#allocation7], 0
    %12 = vsyncpa [#allocation5], 0
    %13 = vsyncpa [#allocation11], 0
    // Predicated region
    $region2: #{_stats_call.1} parent=1 // pred_check
      _
    $region3: #{_stats_call.1} parent=1 // pred_check_branch
      %15 = sbr.rel (0) target = $region5
    $region4: #{_stats_call.1} parent=1 // pred_region
      %17 = vsyncadd [#allocation4], 0
      %s19 = sshll.u32 %s0, 4
      %s20 = int_to_ptr.hbm [resolvable:$true] %s19
      %s21 = sshll.u32 [#allocation3], 4
      %s22 = int_to_ptr.vmem [resolvable:$true] %s21
      %24 = dma.hbm_to_vmem [thread:$0]  %s20, 128, %s22, [#allocation4]
    $region5: #{_stats_call.1} parent=1 // pred_fallthru
      _
    // Predicated region
    $region6: #{_stats_call.1} parent=1 // pred_check
      _
    $region7: #{_stats_call.1} parent=1 // pred_check_branch
      %26 = sbr.rel (0) target = $region9
    $region8: #{_stats_call.1} parent=1 // pred_region
      %28 = vsyncadd [#allocation7], 0
      %s30 = sshll.u32 %s1, 4
      %s31 = int_to_ptr.hbm [resolvable:$true] %s30
      %s32 = sshll.u32 [#allocation6], 4
      %s33 = int_to_ptr.vmem [resolvable:$true] %s32
      %35 = dma.hbm_to_vmem [thread:$0]  %s31, 128, %s33, [#allocation7]
    $region9: #{_stats_call.1} parent=1 // pred_fallthru
      _
    // Predicated region
    $region10: #{_stats_call.1} parent=1 // pred_check
      _
    $region11: #{_stats_call.1} parent=1 // pred_check_branch
      %37 = sbr.rel (0) target = $region13
    $region12: #{_stats_call.1} parent=1 // pred_region
      %39 = vsyncadd [#allocation7], 0
      %s41 = sshll.u32 %s2, 4
      %s42 = int_to_ptr.hbm [resolvable:$true] %s41
      %s43 = sshll.u32 [#allocation8], 4
      %s44 = int_to_ptr.vmem [resolvable:$true] %s43
      %46 = dma.hbm_to_vmem [thread:$0]  %s42, 128, %s44, [#allocation7]
    $region13: #{_stats_call.1} parent=1 // pred_fallthru
      _
    // Predicated region
    $region14: #{_stats_call.1} parent=1 // pred_check
      _
    $region15: #{_stats_call.1} parent=1 // pred_check_branch
      %48 = sbr.rel (0) target = $region17
    $region16: #{_stats_call.1} parent=1 // pred_region
      %50 = dma.done [#allocation4], 128
    $region17: #{_stats_call.1} parent=1 // pred_fallthru
      _
    // Predicated region
    $region18: #{_stats_call.1} parent=1 // pred_check
      _
    $region19: #{_stats_call.1} parent=1 // pred_check_branch
      %52 = sbr.rel (0) target = $region21
    $region20: #{_stats_call.1} parent=1 // pred_region
      %54 = dma.done [#allocation7], 128
    $region21: #{_stats_call.1} parent=1 // pred_fallthru
      _
    // Predicated region
    $region22: #{_stats_call.1} parent=1 // pred_check
      _
    $region23: #{_stats_call.1} parent=1 // pred_check_branch
      %56 = sbr.rel (0) target = $region25
    $region24: #{_stats_call.1} parent=1 // pred_region
      %58 = dma.done [#allocation7], 128
    $region25: #{_stats_call.1} parent=1 // pred_fallthru
      _
    %v59 = vld [vmem:[#allocation3] sm:$0xff]
    %v60 = vld [vmem:[#allocation6] sm:$0xff]
    %v61 = vlaneseq
    %v62 = vshrl.u32 %v61, 7
    %s63 = smul.u32 0, 8
    %v64 = vstv %s63
    %v65 = vadd.s32 %v62, %v64
    %vm66 = vcmp.lt.s32.totalorder %v65, 8
    %p67 = scmp.eq.s32.totalorder 0, 0
    // Predicated region
    $region26: #{_stats_call.1} parent=1 // pred_check
      %p68 = pneg %p67
    $region27: #{_stats_call.1} parent=1 // pred_check_branch
      %70 = sbr.rel (%p68) target = $region29
    $region28: #{_stats_call.1} parent=1 // pred_region
      %v71 = vsel %vm66, %v59, 0.0
      %vm72 = vcmask 130048
      %v73 = vsel %vm72, %v71, 0.0
      %v74 = vrot.slane %v73, 4
      %v75 = vadd.f32 %v73, %v74
      %v76 = vrot.slane %v75, 2
      %v77 = vadd.f32 %v75, %v76
      %v78 = vrot.slane %v77, 1
      %v79 = vadd.f32 %v77, %v78
      %v80 = vmul.f32 %v79, 0.125
      %v81 = vsel %vm66, %v60, 0.0
      %v82 = vsel %vm72, %v81, 0.0
      %v83 = vrot.slane %v82, 4
      %v84 = vadd.f32 %v82, %v83
      %v85 = vrot.slane %v84, 2
      %v86 = vadd.f32 %v84, %v85
      %v87 = vrot.slane %v86, 1
      %v88 = vadd.f32 %v86, %v87
      %v89 = vmul.f32 %v88, 0.125
      %vm90 = vcmask 126976
      %91 = vst.msk [vmem:[#allocation2] sm:$0x1f] %vm90, 0.0
      %vm92 = vcmask 122880
      %93 = vst.msk [vmem:[#allocation2 + $0x5] sm:$0x1] %vm92, %v80
      %94 = vst.msk [vmem:[#allocation2 + $0x6] sm:$0x1] %vm92, %v89
      %95 = vst.msk [vmem:[#allocation2 + $0x7] sm:$0x1] %vm92, 0.0
    $region29: #{_stats_call.1} parent=1 // pred_fallthru
      _
    %v96 = vld [vmem:[#allocation2 + $0x5] sm:$0x1]
    %v97 = vld [vmem:[#allocation2 + $0x6] sm:$0x1]
    %v98 = vperm.slane %v96, 0
    %v99 = vsub.f32 %v59, %v98
    %v100 = vsel %vm66, %v99, 0.0
    %v101 = vperm.slane %v97, 0
    %v102 = vsub.f32 %v60, %v101
    %v103 = vsel %vm66, %v102, 0.0
    %v104 = vld [vmem:[#allocation2] sm:$0x1]
    %vm105 = vcmask 130048
    %v106 = vsel %vm105, %v100, 0.0
    %v107 = vrot.slane %v106, 4
    %v108 = vadd.f32 %v106, %v107
    %v109 = vrot.slane %v108, 2
    %v110 = vadd.f32 %v108, %v109
    %v111 = vrot.slane %v110, 1
    %v112 = vadd.f32 %v110, %v111
    %v113 = vadd.f32 %v104, %v112
    %vm114 = vcmask 122880
    %115 = vst.msk [vmem:[#allocation2] sm:$0x1] %vm114, %v113
    %v116 = vld [vmem:[#allocation2 + $0x1] sm:$0x1]
    %v117 = vmul.f32 %v100, %v100
    %v118 = vsel %vm105, %v117, 0.0
    %v119 = vrot.slane %v118, 4
    %v120 = vadd.f32 %v118, %v119
    %v121 = vrot.slane %v120, 2
    %v122 = vadd.f32 %v120, %v121
    %v123 = vrot.slane %v122, 1
    %v124 = vadd.f32 %v122, %v123
    %v125 = vadd.f32 %v116, %v124
    %126 = vst.msk [vmem:[#allocation2 + $0x1] sm:$0x1] %vm114, %v125
    %v127 = vld [vmem:[#allocation2 + $0x2] sm:$0x1]
    %v128 = vsel %vm105, %v103, 0.0
    %v129 = vrot.slane %v128, 4
    %v130 = vadd.f32 %v128, %v129
    %v131 = vrot.slane %v130, 2
    %v132 = vadd.f32 %v130, %v131
    %v133 = vrot.slane %v132, 1
    %v134 = vadd.f32 %v132, %v133
    %v135 = vadd.f32 %v127, %v134
    %136 = vst.msk [vmem:[#allocation2 + $0x2] sm:$0x1] %vm114, %v135
    %v137 = vld [vmem:[#allocation2 + $0x3] sm:$0x1]
    %v138 = vmul.f32 %v103, %v103
    %v139 = vsel %vm105, %v138, 0.0
    %v140 = vrot.slane %v139, 4
    %v141 = vadd.f32 %v139, %v140
    %v142 = vrot.slane %v141, 2
    %v143 = vadd.f32 %v141, %v142
    %v144 = vrot.slane %v143, 1
    %v145 = vadd.f32 %v143, %v144
    %v146 = vadd.f32 %v137, %v145
    %147 = vst.msk [vmem:[#allocation2 + $0x3] sm:$0x1] %vm114, %v146
    %v148 = vld [vmem:[#allocation2 + $0x4] sm:$0x1]
    %v149 = vmul.f32 %v100, %v103
    %v150 = vsel %vm105, %v149, 0.0
    %v151 = vrot.slane %v150, 4
    %v152 = vadd.f32 %v150, %v151
    %v153 = vrot.slane %v152, 2
    %v154 = vadd.f32 %v152, %v153
    %v155 = vrot.slane %v154, 1
    %v156 = vadd.f32 %v154, %v155
    %v157 = vadd.f32 %v148, %v156
    %158 = vst.msk [vmem:[#allocation2 + $0x4] sm:$0x1] %vm114, %v157
    // Predicated region
    $region30: #{_stats_call.1} parent=1 // pred_check
      %p159 = pneg %p67
    $region31: #{_stats_call.1} parent=1 // pred_check_branch
      %161 = sbr.rel (%p159) target = $region33
    $region32: #{_stats_call.1} parent=1 // pred_region
      %v162 = vld [vmem:[#allocation2] sm:$0x1]
      %v163 = vmul.f32 %v162, 0.125
      %v164 = vld [vmem:[#allocation2 + $0x2] sm:$0x1]
      %v165 = vmul.f32 %v164, 0.125
      %v166 = vld [vmem:[#allocation2 + $0x5] sm:$0x1]
      %v167 = vadd.f32 %v166, %v163
      %v168 = vld [vmem:[#allocation2 + $0x6] sm:$0x1]
      %v169 = vadd.f32 %v168, %v165
      %v170 = vld [vmem:[#allocation2 + $0x1] sm:$0x1]
      %v171 = vmul.f32 %v170, 0.125
      %v172 = vmul.f32 %v163, %v163
      %v173 = vsub.f32 %v171, %v172
      %v174 = vmax.f32 %v173, 0.0
      %v175 = vld [vmem:[#allocation2 + $0x3] sm:$0x1]
      %v176 = vmul.f32 %v175, 0.125
      %v177 = vmul.f32 %v165, %v165
      %v178 = vsub.f32 %v176, %v177
      %v179 = vmax.f32 %v178, 0.0
      %v180 = vld [vmem:[#allocation2 + $0x4] sm:$0x1]
      %v181 = vmul.f32 %v180, 0.125
      %v182 = vmul.f32 %v163, %v165
      %v183 = vsub.f32 %v181, %v182
      %184 = vst.msk [vmem:[#allocation9] sm:$0x1] %vm114, %v167
      %185 = vst.msk [vmem:[#allocation9 + $0x1] sm:$0x1] %vm114, %v174
      %186 = vst.msk [vmem:[#allocation9 + $0x2] sm:$0x1] %vm114, %v169
      %187 = vst.msk [vmem:[#allocation9 + $0x3] sm:$0x1] %vm114, %v179
      %188 = vst.msk [vmem:[#allocation9 + $0x4] sm:$0x1] %vm114, %v183
      %vm189 = vcmask 124928
      %190 = vst.msk [vmem:[#allocation9 + $0x5] sm:$0x7] %vm189, 0.0
      %v191 = vrsqrt.pop %v174
      %v192 = vmul.f32 %v191, %v174
      %v193 = vmul.f32 %v192, %v191
      %v194 = vmul.f32 0.5, %v193
      %v195 = vsub.f32 1.5, %v194
      %v196 = vmul.f32 %v191, %v195
      %vm197 = vweird.f32 %v174
      %vm198 = vweird.f32 %v191
      %vm199 = vmor %vm197, %vm198
      %v200 = vsel %vm199, %v191, %v196
      %v201 = vrsqrt.pop %v179
      %v202 = vmul.f32 %v201, %v179
      %v203 = vmul.f32 %v202, %v201
      %v204 = vmul.f32 0.5, %v203
      %v205 = vsub.f32 1.5, %v204
      %v206 = vmul.f32 %v201, %v205
      %vm207 = vweird.f32 %v179
      %vm208 = vweird.f32 %v201
      %vm209 = vmor %vm207, %vm208
      %v210 = vsel %vm209, %v201, %v206
      %v211 = vmul.f32 %v183, %v200
      %v212 = vmul.f32 %v211, %v210
      %v213 = vmax.f32 %v212, -0.9999995
      %v214 = vmin.f32 %v213, 0.9999995
      %v215 = vmul.f32 %v214, %v214
      %v216 = vsub.f32 1.0, %v215
      %v217 = vrcp.pop %v216
      %v218 = vmul.f32 %v216, %v217
      %v219 = vsub.f32 1.0, %v218
      %v220 = vmul.f32 %v217, %v219
      %v221 = vadd.f32 %v217, %v220
      %vm222 = vweird.f32 %v216
      %vm223 = vweird.f32 %v217
      %vm224 = vmor %vm222, %vm223
      %v225 = vsel %vm224, %v217, %v221
      %v226 = vand.u32 2147483647, %v216
      %vm227 = vcmp.eq.f32.partialorder %v226, 8.507059e+37
      %v228 = vand.u32 %v216, 2147483648
      %v229 = vor.u32 1.1754944e-38, %v228
      %v230 = vsel %vm227, %v229, %v225
      %v231 = vmul.f32 1.0, %v230
      %v232 = vlog2.pop %v216
      %v233 = vmul.f32 %v232, 0.6931472
      %v234 = vmul.f32 %v233, -0.5
      %v235 = vmul.f32 %v214, %v231
      %v236 = vmul.f32 %v235, %v200
      %v237 = vmul.f32 %v236, %v210
      %v238 = vmul.f32 %v214, 0.5
      %v239 = vmul.f32 %v238, %v214
      %v240 = vmul.f32 %v239, %v231
      %v241 = vmul.f32 %v200, %v200
      %v242 = vmul.f32 %v240, %v241
      %v243 = vmul.f32 %v210, %v210
      %v244 = vmul.f32 %v240, %v243
      %245 = vst.msk [vmem:[#allocation10] sm:$0x1] %vm114, %v167
      %246 = vst.msk [vmem:[#allocation10 + $0x1] sm:$0x1] %vm114, %v169
      %247 = vst.msk [vmem:[#allocation10 + $0x2] sm:$0x1] %vm114, %v234
      %248 = vst.msk [vmem:[#allocation10 + $0x3] sm:$0x1] %vm114, %v237
      %249 = vst.msk [vmem:[#allocation10 + $0x4] sm:$0x1] %vm114, %v242
      %250 = vst.msk [vmem:[#allocation10 + $0x5] sm:$0x1] %vm114, %v244
      %vm251 = vcmask 123904
      %252 = vst.msk [vmem:[#allocation10 + $0x6] sm:$0x3] %vm251, 0.0
    $region33: #{_stats_call.1} parent=1 // pred_fallthru
      _
    // Predicated region
    $region34: #{_stats_call.1} parent=1 // pred_check
      _
    $region35: #{_stats_call.1} parent=1 // pred_check_branch
      %254 = sbr.rel (0) target = $region37
    $region36: #{_stats_call.1} parent=1 // pred_region
      %256 = vsyncadd [#allocation5], 0
      %s258 = sshll.u32 [#allocation9], 4
      %s259 = int_to_ptr.vmem [resolvable:$true] %s258
      %s260 = sshll.u32 %s3, 4
      %s261 = int_to_ptr.hbm [resolvable:$true] %s260
      %263 = dma.vmem_to_hbm [thread:$0]  %s259, 128, %s261, [#allocation5]
    $region37: #{_stats_call.1} parent=1 // pred_fallthru
      _
    // Predicated region
    $region38: #{_stats_call.1} parent=1 // pred_check
      _
    $region39: #{_stats_call.1} parent=1 // pred_check_branch
      %265 = sbr.rel (0) target = $region41
    $region40: #{_stats_call.1} parent=1 // pred_region
      %267 = vsyncadd [#allocation11], 0
      %s269 = sshll.u32 [#allocation10], 4
      %s270 = int_to_ptr.vmem [resolvable:$true] %s269
      %s271 = sshll.u32 %s4, 4
      %s272 = int_to_ptr.hbm [resolvable:$true] %s271
      %274 = dma.vmem_to_hbm [thread:$0]  %s270, 128, %s272, [#allocation11]
    $region41: #{_stats_call.1} parent=1 // pred_fallthru
      _
    // Predicated region
    $region42: #{_stats_call.1} parent=1 // pred_check
      _
    $region43: #{_stats_call.1} parent=1 // pred_check_branch
      %276 = sbr.rel (0) target = $region45
    $region44: #{_stats_call.1} parent=1 // pred_region
      %278 = dma.done [#allocation5], 128
    $region45: #{_stats_call.1} parent=1 // pred_fallthru
      _
    // Predicated region
    $region46: #{_stats_call.1} parent=1 // pred_check
      _
    $region47: #{_stats_call.1} parent=1 // pred_check_branch
      %280 = sbr.rel (0) target = $region49
    $region48: #{_stats_call.1} parent=1 // pred_region
      %282 = dma.done [#allocation11], 128
    $region49: #{_stats_call.1} parent=1 // pred_fallthru
      _
    %283 = vsyncpa [#allocation4], 1
    %284 = vsyncpa [#allocation7], 1
    %285 = vsyncpa [#allocation5], 1
    %286 = vsyncpa [#allocation11], 1

</llo_original>
